<compile_context>
chip_gen: v5e
topology: v5e:2x2
jax: 0.10.0
libtpu: 0.0.40
codegen_flags: <defaults>
</compile_context>

<pallas_src>
import jax
import jax.numpy as jnp
import numpy as np
from jax.experimental import pallas as pl
from jax.experimental.pallas import tpu as pltpu


def _make_cfg_kernel(bc, C):
    """Kernel processing `bc` samples per grid step (channels x HW tiles)."""

    def kernel(
        sscale_ref,   # SMEM (B,)  f32 : 1/sqrt(sigma^2+1) per sample
        imix_ref,     # SMEM (2,)  f32 : [0.5+image_cfg, 0.5-image_cfg]
        z_ref,        # VMEM (bc, C, HW) : latent z
        ci_ref,       # VMEM (bc, C, HW) : cond   c_concat
        ui_ref,       # VMEM (bc, C, HW) : uncond c_concat
        tb_ref,       # VMEM (bc, C, 1)  : combined text bias (text_cfg folded)
        w_ref,        # VMEM (C, 2C)     : fused weights [W1_top^T | W1_bot^T]
        out_ref,      # VMEM (bc, C, HW)
        xstk_ref,     # VMEM scratch (2C, HW) : sublane-stacked [z ; mix]
    ):
        chunk = pl.program_id(0)
        a_img = imix_ref[0]
        b_img = imix_ref[1]
        w = w_ref[...]                       # weights resident across samples

        for j in range(bc):                  # static unroll over chunk samples
            ss = sscale_ref[chunk * bc + j]
            # Image-CFG mix formed BEFORE the contraction (collapses the two
            # c_concat branches into one shared operand).
            mix = a_img * ci_ref[j] + b_img * ui_ref[j]           # (C, HW)
            xstk_ref[0:C, :] = z_ref[j]
            xstk_ref[C:2 * C, :] = mix
            # Single fused K=2C dot (fills all 8 f32 sublanes).
            h = jnp.dot(w, xstk_ref[...],
                        preferred_element_type=jnp.float32)       # (C, HW)
            out_ref[j] = (ss * h + tb_ref[j]).astype(out_ref.dtype)

    return kernel


def _tensorcores_per_chip():
    """Heuristic: 1 TC on v5e/v6e, 2 TCs otherwise (v7x, v4/v5p megacore)."""
    try:
        kind = jax.devices()[0].device_kind.lower()
    except Exception:
        return 1
    single_tc_tags = ("v5e", "v5 lite", "v5lite", "v6e", "v6 lite", "v6lite")
    return 1 if any(t in kind for t in single_tc_tags) else 2


def cfg_denoiser(z, sigma, cond, uncond, text_cfg_scale, image_cfg_scale,
                 w1, w_txt, batch_chunks=None):
    """z: (B, C, H, W) NCHW; sigma: (B,); cond/uncond dicts as in PyTorch."""
    B, C, H, W = z.shape
    HW = H * W
    cond_txt = cond["c_crossattn"][0]        # (B, S, D)
    uncond_txt = uncond["c_crossattn"][0]    # (B, S, D)
    cond_img = cond["c_concat"][0]           # (B, C, H, W)
    uncond_img = uncond["c_concat"][0]       # (B, C, H, W)

    # Channels-on-sublanes / HW-on-lanes, lane-dense (HW multiple of 128).
    z_cf = z.reshape(B, C, HW).astype(jnp.float32)
    ci_cf = cond_img.reshape(B, C, HW).astype(jnp.float32)
    ui_cf = uncond_img.reshape(B, C, HW).astype(jnp.float32)

    # Fused (C, 2C) weight: columns [:C] contract z, columns [C:] contract mix.
    w_stack = jnp.concatenate(
        [jnp.transpose(w1[:C, :], (1, 0)),
         jnp.transpose(w1[C:, :], (1, 0))], axis=1).astype(jnp.float32)

    sscale = (1.0 / jnp.sqrt(sigma.astype(jnp.float32) ** 2 + 1.0))     # (B,)

    tcs = jnp.asarray(text_cfg_scale, jnp.float32)
    ics = jnp.asarray(image_cfg_scale, jnp.float32)

    # Text path precomputed in the wrapper (tiny (B,D)@(D,C) XLA work); the
    # text-cfg scale is folded directly into a single combined bias.
    tb_c = jnp.mean(cond_txt.astype(jnp.float32), axis=1) @ w_txt.astype(jnp.float32)
    tb_u = jnp.mean(uncond_txt.astype(jnp.float32), axis=1) @ w_txt.astype(jnp.float32)
    tb_comb = ((0.5 + tcs) * tb_c + (0.5 - tcs) * tb_u).reshape(B, C, 1)
    imix = jnp.stack([0.5 + ics, 0.5 - ics]).astype(jnp.float32)        # (2,)

    if batch_chunks is None:
        tc = _tensorcores_per_chip()
        batch_chunks = tc if (tc > 1 and B % tc == 0) else 1
    bc = B // batch_chunks

    smem_spec = pl.BlockSpec(memory_space=pltpu.MemorySpace.SMEM)
    kernel = _make_cfg_kernel(bc, C)

    out = pl.pallas_call(
        kernel,
        out_shape=jax.ShapeDtypeStruct((B, C, HW), jnp.float32),
        grid_spec=pltpu.PrefetchScalarGridSpec(
            num_scalar_prefetch=0,
            grid=(batch_chunks,),
            in_specs=[
                smem_spec,                                        # sscale
                smem_spec,                                        # image-mix coefs
                pl.BlockSpec((bc, C, HW), lambda i: (i, 0, 0)),   # z
                pl.BlockSpec((bc, C, HW), lambda i: (i, 0, 0)),   # cond_img
                pl.BlockSpec((bc, C, HW), lambda i: (i, 0, 0)),   # uncond_img
                pl.BlockSpec((bc, C, 1), lambda i: (i, 0, 0)),    # combined bias
                pl.BlockSpec((C, 2 * C), lambda i: (0, 0)),       # fused weights
            ],
            out_specs=pl.BlockSpec((bc, C, HW), lambda i: (i, 0, 0)),
            scratch_shapes=[pltpu.VMEM((2 * C, HW), jnp.float32)],
        ),
        compiler_params=pltpu.CompilerParams(
            dimension_semantics=("parallel",)),
    )(sscale, imix, z_cf, ci_cf, ui_cf, tb_comb, w_stack)

    # (B, C, HW) -> NCHW, matching the PyTorch output convention.
    return out.reshape(B, C, H, W)


def cfg_denoiser_reference(z, sigma, cond, uncond, text_cfg, image_cfg,
                           w1, w_txt):
    """Pure-JAX reference mirroring the PyTorch module line by line."""
    B, C, H, W = z.shape
    cfg_z = jnp.concatenate([z, z, z], axis=0)
    cfg_sigma = jnp.concatenate([sigma, sigma, sigma], axis=0)
    ca = jnp.concatenate([cond["c_crossattn"][0], uncond["c_crossattn"][0],
                          cond["c_crossattn"][0]], axis=0)
    cc = jnp.concatenate([cond["c_concat"][0], cond["c_concat"][0],
                          uncond["c_concat"][0]], axis=0)

    # synthetic inner model (same math as the kernel's)
    x = jnp.concatenate(
        [jnp.transpose(cfg_z, (0, 2, 3, 1)).reshape(3 * B, H * W, C),
         jnp.transpose(cc, (0, 2, 3, 1)).reshape(3 * B, H * W, C)], axis=-1)
    ss = (1.0 / jnp.sqrt(cfg_sigma ** 2 + 1.0))[:, None, None]
    tbias = jnp.mean(ca, axis=1) @ w_txt                     # (3B, C)
    out = jnp.einsum("nrk,kc->nrc", x, w1) * ss + tbias[:, None, :]
    out = jnp.transpose(out.reshape(3 * B, H, W, C), (0, 3, 1, 2))

    out_cond, out_img_cond, out_txt_cond = jnp.split(out, 3, axis=0)
    return (0.5 * (out_img_cond + out_txt_cond)
            + text_cfg * (out_cond - out_img_cond)
            + image_cfg * (out_cond - out_txt_cond))


if __name__ == "__main__":
    B, C, H, W = 2, 4, 16, 16
    S, D = 8, 32
    key = jax.random.PRNGKey(0)
    ks = jax.random.split(key, 8)

    z = jax.random.normal(ks[0], (B, C, H, W), jnp.float32)
    sigma = jnp.abs(jax.random.normal(ks[1], (B,), jnp.float32)) + 0.1
    cond = {
        "c_crossattn": [jax.random.normal(ks[2], (B, S, D), jnp.float32)],
        "c_concat": [jax.random.normal(ks[3], (B, C, H, W), jnp.float32)],
    }
    # Nonzero, distinct uncond image so a cond/uncond image mix-up would be
    # caught.
    uncond = {
        "c_crossattn": [jax.random.normal(ks[4], (B, S, D), jnp.float32)],
        "c_concat": [jax.random.normal(ks[7], (B, C, H, W), jnp.float32)],
    }
    # deterministic synthetic inner-model parameters
    w1 = jax.random.normal(ks[5], (2 * C, C), jnp.float32) * 0.1
    w_txt = jax.random.normal(ks[6], (D, C), jnp.float32) * 0.1

    text_cfg_scale = 7.5
    image_cfg_scale = 1.5

    out = cfg_denoiser(z, sigma, cond, uncond,
                       text_cfg_scale, image_cfg_scale, w1, w_txt)
    out = jax.block_until_ready(out)

    ref = cfg_denoiser_reference(z, sigma, cond, uncond,
                                 text_cfg_scale, image_cfg_scale, w1, w_txt)
    # Algebraic collapse reassociates f32 ops -> allow a few-ulp tolerance.
    np.testing.assert_allclose(np.asarray(out), np.asarray(ref),
                               rtol=2e-5, atol=2e-5)
    print("KERNEL_OK")
</pallas_src>

<mosaic_0001>
module attributes {stable_mosaic.version = 11 : i64} {
  func.func @kernel(%arg0: i32, %arg1: memref<2xf32, #tpu.memory_space<smem>>, %arg2: memref<2xf32, #tpu.memory_space<smem>>, %arg3: memref<1x4x256xf32, #tpu.memory_space<vmem>>, %arg4: memref<1x4x256xf32, #tpu.memory_space<vmem>>, %arg5: memref<1x4x256xf32, #tpu.memory_space<vmem>>, %arg6: memref<1x4x1xf32, #tpu.memory_space<vmem>>, %arg7: memref<4x8xf32, #tpu.memory_space<vmem>>, %arg8: memref<1x4x256xf32, #tpu.memory_space<vmem>>, %arg9: memref<8x256xf32, #tpu.memory_space<vmem>>) attributes {dimension_semantics = [#tpu.dimension_semantics<parallel>], iteration_bounds = array<i64: 2>, scalar_prefetch = 0 : i64, scratch_operands = 1 : i64, tpu.core_type = #tpu.core_type<tc>, window_params = [{transform_indices = @transform_0, window_bounds = array<i64: 2>}, {transform_indices = @transform_1, window_bounds = array<i64: 2>}, {transform_indices = @transform_2, window_bounds = array<i64: 1, 4, 256>}, {transform_indices = @transform_3, window_bounds = array<i64: 1, 4, 256>}, {transform_indices = @transform_4, window_bounds = array<i64: 1, 4, 256>}, {transform_indices = @transform_5, window_bounds = array<i64: 1, 4, 1>}, {pipeline_mode = #tpu.pipeline_mode<synchronous>, transform_indices = @transform_6, window_bounds = array<i64: 4, 8>}, {transform_indices = @transform_7, window_bounds = array<i64: 1, 4, 256>}]} {
    %c0 = arith.constant 0 : index
    %0 = memref.load %arg2[%c0] : memref<2xf32, #tpu.memory_space<smem>>
    %c1 = arith.constant 1 : index
    %1 = memref.load %arg2[%c1] : memref<2xf32, #tpu.memory_space<smem>>
    %c0_0 = arith.constant 0 : index
    %c0_1 = arith.constant 0 : index
    %2 = vector.load %arg7[%c0_0, %c0_1] : memref<4x8xf32, #tpu.memory_space<vmem>>, vector<4x8xf32>
    %c1_i32 = arith.constant 1 : i32
    %3 = arith.muli %arg0, %c1_i32 : i32
    %c0_i32 = arith.constant 0 : i32
    %4 = arith.addi %3, %c0_i32 : i32
    %5 = arith.index_cast %4 : i32 to index
    %6 = memref.load %arg1[%5] : memref<2xf32, #tpu.memory_space<smem>>
    %c0_2 = arith.constant 0 : index
    %c0_3 = arith.constant 0 : index
    %c0_4 = arith.constant 0 : index
    %7 = vector.load %arg4[%c0_2, %c0_3, %c0_4] : memref<1x4x256xf32, #tpu.memory_space<vmem>>, vector<1x4x256xf32>
    %8 = vector.shape_cast %7 : vector<1x4x256xf32> to vector<4x256xf32>
    %9 = vector.broadcast %0 : f32 to vector<4x256xf32>
    %10 = arith.mulf %9, %8 : vector<4x256xf32>
    %c0_5 = arith.constant 0 : index
    %c0_6 = arith.constant 0 : index
    %c0_7 = arith.constant 0 : index
    %11 = vector.load %arg5[%c0_5, %c0_6, %c0_7] : memref<1x4x256xf32, #tpu.memory_space<vmem>>, vector<1x4x256xf32>
    %12 = vector.shape_cast %11 : vector<1x4x256xf32> to vector<4x256xf32>
    %13 = vector.broadcast %1 : f32 to vector<4x256xf32>
    %14 = arith.mulf %13, %12 : vector<4x256xf32>
    %15 = arith.addf %10, %14 : vector<4x256xf32>
    %c0_8 = arith.constant 0 : index
    %c0_9 = arith.constant 0 : index
    %c0_10 = arith.constant 0 : index
    %16 = vector.load %arg3[%c0_8, %c0_9, %c0_10] : memref<1x4x256xf32, #tpu.memory_space<vmem>>, vector<1x4x256xf32>
    %17 = vector.shape_cast %16 : vector<1x4x256xf32> to vector<4x256xf32>
    %c0_11 = arith.constant 0 : index
    %c0_12 = arith.constant 0 : index
    %18 = vector.load %arg9[%c0_11, %c0_12] : memref<8x256xf32, #tpu.memory_space<vmem>>, vector<4x256xf32>
    tpu.vector_store %arg9[%c0_11, %c0_12], %17 {strides = array<i32>} : memref<8x256xf32, #tpu.memory_space<vmem>>, vector<4x256xf32>,
    %c4 = arith.constant 4 : index
    %c0_13 = arith.constant 0 : index
    %19 = vector.load %arg9[%c4, %c0_13] : memref<8x256xf32, #tpu.memory_space<vmem>>, vector<4x256xf32>
    tpu.vector_store %arg9[%c4, %c0_13], %15 {strides = array<i32>} : memref<8x256xf32, #tpu.memory_space<vmem>>, vector<4x256xf32>,
    %c0_14 = arith.constant 0 : index
    %c0_15 = arith.constant 0 : index
    %20 = vector.load %arg9[%c0_14, %c0_15] : memref<8x256xf32, #tpu.memory_space<vmem>>, vector<8x256xf32>
    %cst = arith.constant dense<0.000000e+00> : vector<4x256xf32>
    %21 = tpu.matmul %2, %20, %cst {dimension_numbers = #tpu.dot_dimension_numbers<[1], [0], [0], [1], [0, 0, 1, 1], [], []>} : vector<4x8xf32>, vector<8x256xf32>, vector<4x256xf32> -> vector<4x256xf32>
    %22 = vector.broadcast %6 : f32 to vector<4x256xf32>
    %23 = arith.mulf %22, %21 : vector<4x256xf32>
    %c0_16 = arith.constant 0 : index
    %c0_17 = arith.constant 0 : index
    %c0_18 = arith.constant 0 : index
    %24 = vector.load %arg6[%c0_16, %c0_17, %c0_18] : memref<1x4x1xf32, #tpu.memory_space<vmem>>, vector<1x4x1xf32>
    %25 = vector.shape_cast %24 : vector<1x4x1xf32> to vector<4x1xf32>
    %26 = vector.broadcast %25 : vector<4x1xf32> to vector<4x256xf32>
    %27 = arith.addf %23, %26 : vector<4x256xf32>
    %c0_19 = arith.constant 0 : index
    %c0_20 = arith.constant 0 : index
    %c0_21 = arith.constant 0 : index
    %28 = vector.load %arg8[%c0_19, %c0_20, %c0_21] : memref<1x4x256xf32, #tpu.memory_space<vmem>>, vector<1x4x256xf32>
    %29 = vector.shape_cast %28 : vector<1x4x256xf32> to vector<4x256xf32>
    %30 = vector.shape_cast %27 : vector<4x256xf32> to vector<1x4x256xf32>
    tpu.vector_store %arg8[%c0_19, %c0_20, %c0_21], %30 {strides = array<i32>} : memref<1x4x256xf32, #tpu.memory_space<vmem>>, vector<1x4x256xf32>,
    return
  }
  func.func @transform_0(%arg0: i32) -> i32 {
    %c0_i32 = arith.constant 0 : i32
    %c0_i32_0 = arith.constant 0 : i32
    return %c0_i32 : i32
  }
  func.func @transform_1(%arg0: i32) -> i32 {
    %c0_i32 = arith.constant 0 : i32
    %c0_i32_0 = arith.constant 0 : i32
    return %c0_i32 : i32
  }
  func.func @transform_2(%arg0: i32) -> (i32, i32, i32) {
    %c0_i32 = arith.constant 0 : i32
    %c0_i32_0 = arith.constant 0 : i32
    %c0_i32_1 = arith.constant 0 : i32
    return %arg0, %c0_i32, %c0_i32_0 : i32, i32, i32
  }
  func.func @transform_3(%arg0: i32) -> (i32, i32, i32) {
    %c0_i32 = arith.constant 0 : i32
    %c0_i32_0 = arith.constant 0 : i32
    %c0_i32_1 = arith.constant 0 : i32
    return %arg0, %c0_i32, %c0_i32_0 : i32, i32, i32
  }
  func.func @transform_4(%arg0: i32) -> (i32, i32, i32) {
    %c0_i32 = arith.constant 0 : i32
    %c0_i32_0 = arith.constant 0 : i32
    %c0_i32_1 = arith.constant 0 : i32
    return %arg0, %c0_i32, %c0_i32_0 : i32, i32, i32
  }
  func.func @transform_5(%arg0: i32) -> (i32, i32, i32) {
    %c0_i32 = arith.constant 0 : i32
    %c0_i32_0 = arith.constant 0 : i32
    %c0_i32_1 = arith.constant 0 : i32
    return %arg0, %c0_i32, %c0_i32_0 : i32, i32, i32
  }
  func.func @transform_6(%arg0: i32) -> (i32, i32) {
    %c0_i32 = arith.constant 0 : i32
    %c0_i32_0 = arith.constant 0 : i32
    %c0_i32_1 = arith.constant 0 : i32
    return %c0_i32, %c0_i32_0 : i32, i32
  }
  func.func @transform_7(%arg0: i32) -> (i32, i32, i32) {
    %c0_i32 = arith.constant 0 : i32
    %c0_i32_0 = arith.constant 0 : i32
    %c0_i32_1 = arith.constant 0 : i32
    return %arg0, %c0_i32, %c0_i32_0 : i32, i32, i32
  }
}

</mosaic_0001>

<llo_original>
// kernel: tpu_custom_call.1
$region0: #{tpu_custom_call.1}
  #allocation0 [shape = 'u32[]', space=smem, size = 0x4, offset = 0x4, fixed_abs, tag = 'smem constant byte address 0x4 - core index']
  #allocation1 [shape = 'u32[72,128]{1,0:T(1,128)}', space=vmem, size = 0x9000, scoped, tag = 'internal scratch']
  #allocation2 [shape = 'f32[8,256]{1,0:T(8,128)}', space=vmem, size = 0x2000, scoped, tag = 'scratch operand']
  %s0 = inlined_call_operand.vmem [shape: f32[2], index: 0, kind: input, shape index: {}]
  %s1 = inlined_call_operand.vmem [shape: f32[2], index: 1, kind: input, shape index: {}]
  %s2 = inlined_call_operand.hbm [shape: f32[2,4,256], index: 2, kind: input, shape index: {}]
  %s3 = inlined_call_operand.hbm [shape: f32[2,4,256], index: 3, kind: input, shape index: {}]
  %s4 = inlined_call_operand.hbm [shape: f32[2,4,256], index: 4, kind: input, shape index: {}]
  %s5 = inlined_call_operand.vmem [shape: f32[2,4,1], index: 5, kind: input, shape index: {}]
  %s6 = inlined_call_operand.vmem [shape: f32[4,8], index: 6, kind: input, shape index: {}]
  %s7 = inlined_call_operand.hbm [shape: f32[2,4,256], index: 7, kind: output, shape index: {}]
  %s8 = sld [smem:[#allocation0]]
  $region81: #{tpu_custom_call.1} parent=0
    _
  %s10 = ssub.s32 1, %s8
  %s11 = scalar_select 0, %s10, %s8
  $region1: #{tpu_custom_call.1} parent=0
    #allocation3 [shape = 'u8[512]{0}', space=smem, size = 0x200, scoped, tag = 'input window, operand 0, single buffered']
    #allocation4 [shape = 's32[2]{0}', space=sflag, size = 0x8, scoped, tag = 'scoped memory for tpu_custom_call.1']
    #allocation5 [shape = 's32[2]{0}', space=sflag, size = 0x8, scoped, tag = 'scoped memory for tpu_custom_call.1']
    #allocation6 [shape = 's32[2]{0}', space=sflag, size = 0x8, scoped, tag = 'scoped memory for tpu_custom_call.1']
    #allocation7 [shape = 'u8[512]{0}', space=smem, size = 0x200, scoped, tag = 'input window, operand 1, single buffered']
    #allocation8 [shape = 's32[1]{0}', space=sflag, size = 0x4, scoped, tag = 'scoped memory for tpu_custom_call.1']
    #allocation9 [shape = 'u8[8192]{0}', space=vmem, size = 0x2000, scoped, tag = 'input window, operand 2']
    #allocation10 [shape = 'u8[8192]{0}', space=vmem, size = 0x2000, scoped, tag = 'input window, operand 3']
    #allocation11 [shape = 's32[2]{0}', space=sflag, size = 0x8, scoped, tag = 'scoped memory for tpu_custom_call.1']
    #allocation12 [shape = 'u8[8192]{0}', space=vmem, size = 0x2000, scoped, tag = 'input window, operand 4']
    #allocation13 [shape = 'u8[8192]{0}', space=vmem, size = 0x2000, scoped, tag = 'output window, operand 0']
    %12 = vsyncpa [#allocation6], 0
    %13 = vsyncpa [#allocation8], 0
    %14 = vsyncpa [#allocation4], 0
    %s15 = scalar_lea.sflag [#allocation4], 1
    %16 = vsyncpa %s15, 0
    %17 = vsyncpa [#allocation11], 0
    %s18 = scalar_lea.sflag [#allocation11], 1
    %19 = vsyncpa %s18, 0
    %20 = vsyncpa [#allocation5], 0
    %s21 = scalar_lea.sflag [#allocation5], 1
    %22 = vsyncpa %s21, 0
    loop: start=0, step=1, limit=4
    $region2: #{tpu_custom_call.1} parent=1 // loop_pre_header
      _
    $region3: #{tpu_custom_call.1} parent=1 // loop_header
      %s24 = sphi 0, %s28
      %p25 = scmp.ge.s32.totalorder %s24, 4
      %s32 = sphi 0, %s32
      %s34 = sphi 0, %s32
      %s35 = sphi 0, %s34
      %s49 = sphi 0, %s35
      %s53 = sphi 0, %s53
      %s55 = sphi 0, %s53
      %s56 = sphi 0, %s55
      %s70 = sphi 0, %s56
      %s76 = sphi 0, %s78
      %s79 = sphi 0, %s76
      %s80 = sphi 0, %s79
      %s96 = sphi 0, %s80
      %s102 = sphi 0, %s104
      %s105 = sphi 0, %s102
      %s106 = sphi 0, %s105
      %s122 = sphi 0, %s106
      %s128 = sphi 0, %s130
      %s131 = sphi 0, %s128
      %s132 = sphi 0, %s131
      %s148 = sphi 0, %s132
      %s154 = sphi 0, %s156
      %s157 = sphi 0, %s154
      %s158 = sphi 0, %s157
      %s174 = sphi 0, %s158
      %s178 = sphi 0, %s178
      %s180 = sphi 0, %s178
      %s181 = sphi 0, %s180
      %s195 = sphi 0, %s181
      %s201 = sphi 0, %s203
      %s204 = sphi 0, %s201
      %s205 = sphi 0, %s204
      %s221 = sphi 0, %s205
    $region4: #{tpu_custom_call.1} parent=1 // loop_header_branch
      %27 = sbr.rel (%p25) target = $region8
    $region5: #{tpu_custom_call.1} parent=1 // loop_body
      %s29 = ssub.s32 %s24, 1
      %s30 = ssub.s32 %s24, 2
      %s31 = sadd.s32 %s24, 1
      %s33 = sadd.s32 %s32, 1
      %p36 = scmp.eq.s32.totalorder %s24, 1
      %p37 = scmp.ne.s32.totalorder %s32, %s34
      %p38 = scmp.eq.s32.totalorder %s24, 0
      %p39 = por %p37, %p38
      %p40 = scmp.ne.s32.totalorder %s32, %s34
      %p41 = scmp.eq.s32.totalorder %s29, 1
      %p42 = por %p40, %p41
      %p43 = scmp.ne.s32.totalorder %s34, %s35
      %p44 = scmp.eq.s32.totalorder %s29, 0
      %p45 = por %p43, %p44
      %p46 = scmp.ne.s32.totalorder %s34, %s35
      %p47 = scmp.eq.s32.totalorder %s30, 1
      %p48 = por %p46, %p47
      %p50 = scmp.ne.s32.totalorder %s35, %s49
      %p51 = scmp.eq.s32.totalorder %s30, 0
      %p52 = por %p50, %p51
      %s54 = sadd.s32 %s53, 1
      %p57 = scmp.eq.s32.totalorder %s24, 1
      %p58 = scmp.ne.s32.totalorder %s53, %s55
      %p59 = scmp.eq.s32.totalorder %s24, 0
      %p60 = por %p58, %p59
      %p61 = scmp.ne.s32.totalorder %s53, %s55
      %p62 = scmp.eq.s32.totalorder %s29, 1
      %p63 = por %p61, %p62
      %p64 = scmp.ne.s32.totalorder %s55, %s56
      %p65 = scmp.eq.s32.totalorder %s29, 0
      %p66 = por %p64, %p65
      %p67 = scmp.ne.s32.totalorder %s55, %s56
      %p68 = scmp.eq.s32.totalorder %s30, 1
      %p69 = por %p67, %p68
      %p71 = scmp.ne.s32.totalorder %s56, %s70
      %p72 = scmp.eq.s32.totalorder %s30, 0
      %p73 = por %p71, %p72
      %s74 = ssub.s32 %s24, %s31
      %p75 = scmp.eq.s32.totalorder %s74, 0
      %s77 = sadd.s32 %s76, 1
      %s78 = scalar_select %p75, %s76, %s77
      %p81 = pneg %p75
      %p82 = scmp.eq.s32.totalorder %s24, 1
      %p83 = por %p81, %p82
      %p84 = scmp.ne.s32.totalorder %s76, %s79
      %p85 = scmp.eq.s32.totalorder %s24, 0
      %p86 = por %p84, %p85
      %p87 = scmp.ne.s32.totalorder %s76, %s79
      %p88 = scmp.eq.s32.totalorder %s29, 1
      %p89 = por %p87, %p88
      %p90 = scmp.ne.s32.totalorder %s79, %s80
      %p91 = scmp.eq.s32.totalorder %s29, 0
      %p92 = por %p90, %p91
      %p93 = scmp.ne.s32.totalorder %s79, %s80
      %p94 = scmp.eq.s32.totalorder %s30, 1
      %p95 = por %p93, %p94
      %p97 = scmp.ne.s32.totalorder %s80, %s96
      %p98 = scmp.eq.s32.totalorder %s30, 0
      %p99 = por %p97, %p98
      %s100 = ssub.s32 %s24, %s31
      %p101 = scmp.eq.s32.totalorder %s100, 0
      %s103 = sadd.s32 %s102, 1
      %s104 = scalar_select %p101, %s102, %s103
      %p107 = pneg %p101
      %p108 = scmp.eq.s32.totalorder %s24, 1
      %p109 = por %p107, %p108
      %p110 = scmp.ne.s32.totalorder %s102, %s105
      %p111 = scmp.eq.s32.totalorder %s24, 0
      %p112 = por %p110, %p111
      %p113 = scmp.ne.s32.totalorder %s102, %s105
      %p114 = scmp.eq.s32.totalorder %s29, 1
      %p115 = por %p113, %p114
      %p116 = scmp.ne.s32.totalorder %s105, %s106
      %p117 = scmp.eq.s32.totalorder %s29, 0
      %p118 = por %p116, %p117
      %p119 = scmp.ne.s32.totalorder %s105, %s106
      %p120 = scmp.eq.s32.totalorder %s30, 1
      %p121 = por %p119, %p120
      %p123 = scmp.ne.s32.totalorder %s106, %s122
      %p124 = scmp.eq.s32.totalorder %s30, 0
      %p125 = por %p123, %p124
      %s126 = ssub.s32 %s24, %s31
      %p127 = scmp.eq.s32.totalorder %s126, 0
      %s129 = sadd.s32 %s128, 1
      %s130 = scalar_select %p127, %s128, %s129
      %p133 = pneg %p127
      %p134 = scmp.eq.s32.totalorder %s24, 1
      %p135 = por %p133, %p134
      %p136 = scmp.ne.s32.totalorder %s128, %s131
      %p137 = scmp.eq.s32.totalorder %s24, 0
      %p138 = por %p136, %p137
      %p139 = scmp.ne.s32.totalorder %s128, %s131
      %p140 = scmp.eq.s32.totalorder %s29, 1
      %p141 = por %p139, %p140
      %p142 = scmp.ne.s32.totalorder %s131, %s132
      %p143 = scmp.eq.s32.totalorder %s29, 0
      %p144 = por %p142, %p143
      %p145 = scmp.ne.s32.totalorder %s131, %s132
      %p146 = scmp.eq.s32.totalorder %s30, 1
      %p147 = por %p145, %p146
      %p149 = scmp.ne.s32.totalorder %s132, %s148
      %p150 = scmp.eq.s32.totalorder %s30, 0
      %p151 = por %p149, %p150
      %s152 = ssub.s32 %s24, %s31
      %p153 = scmp.eq.s32.totalorder %s152, 0
      %s155 = sadd.s32 %s154, 1
      %s156 = scalar_select %p153, %s154, %s155
      %p159 = pneg %p153
      %p160 = scmp.eq.s32.totalorder %s24, 1
      %p161 = por %p159, %p160
      %p162 = scmp.ne.s32.totalorder %s154, %s157
      %p163 = scmp.eq.s32.totalorder %s24, 0
      %p164 = por %p162, %p163
      %p165 = scmp.ne.s32.totalorder %s154, %s157
      %p166 = scmp.eq.s32.totalorder %s29, 1
      %p167 = por %p165, %p166
      %p168 = scmp.ne.s32.totalorder %s157, %s158
      %p169 = scmp.eq.s32.totalorder %s29, 0
      %p170 = por %p168, %p169
      %p171 = scmp.ne.s32.totalorder %s157, %s158
      %p172 = scmp.eq.s32.totalorder %s30, 1
      %p173 = por %p171, %p172
      %p175 = scmp.ne.s32.totalorder %s158, %s174
      %p176 = scmp.eq.s32.totalorder %s30, 0
      %p177 = por %p175, %p176
      %s179 = sadd.s32 %s178, 1
      %p182 = scmp.eq.s32.totalorder %s24, 1
      %p183 = scmp.ne.s32.totalorder %s178, %s180
      %p184 = scmp.eq.s32.totalorder %s24, 0
      %p185 = por %p183, %p184
      %p186 = scmp.ne.s32.totalorder %s178, %s180
      %p187 = scmp.eq.s32.totalorder %s29, 1
      %p188 = por %p186, %p187
      %p189 = scmp.ne.s32.totalorder %s180, %s181
      %p190 = scmp.eq.s32.totalorder %s29, 0
      %p191 = por %p189, %p190
      %p192 = scmp.ne.s32.totalorder %s180, %s181
      %p193 = scmp.eq.s32.totalorder %s30, 1
      %p194 = por %p192, %p193
      %p196 = scmp.ne.s32.totalorder %s181, %s195
      %p197 = scmp.eq.s32.totalorder %s30, 0
      %p198 = por %p196, %p197
      %s199 = ssub.s32 %s24, %s31
      %p200 = scmp.eq.s32.totalorder %s199, 0
      %s202 = sadd.s32 %s201, 1
      %s203 = scalar_select %p200, %s201, %s202
      %p206 = pneg %p200
      %p207 = scmp.eq.s32.totalorder %s24, 1
      %p208 = por %p206, %p207
      %p209 = scmp.ne.s32.totalorder %s201, %s204
      %p210 = scmp.eq.s32.totalorder %s24, 0
      %p211 = por %p209, %p210
      %p212 = scmp.ne.s32.totalorder %s201, %s204
      %p213 = scmp.eq.s32.totalorder %s29, 1
      %p214 = por %p212, %p213
      %p215 = scmp.ne.s32.totalorder %s204, %s205
      %p216 = scmp.eq.s32.totalorder %s29, 0
      %p217 = por %p215, %p216
      %p218 = scmp.ne.s32.totalorder %s204, %s205
      %p219 = scmp.eq.s32.totalorder %s30, 1
      %p220 = por %p218, %p219
      %p222 = scmp.ne.s32.totalorder %s205, %s221
      %p223 = scmp.eq.s32.totalorder %s30, 0
      %p224 = por %p222, %p223
      %p225 = scmp.le.s32.totalorder 1, %s24
      %p226 = scmp.lt.s32.totalorder %s24, 3
      %p227 = pnand %p225, %p226
      %p228 = pneg %p227
      // Predicated region
      $region9: #{tpu_custom_call.1} parent=5 // pred_check
        _
      $region10: #{tpu_custom_call.1} parent=5 // pred_check_branch
        %230 = sbr.rel (%p227) target = $region12
      $region11: #{tpu_custom_call.1} parent=5 // pred_region
        %s231 = ssub.s32 %s24, 1
        // Predicated region
        $region13: #{tpu_custom_call.1} parent=11 // pred_check
          %p232 = pneg %p45
        $region14: #{tpu_custom_call.1} parent=11 // pred_check_branch
          %234 = sbr.rel (%p232) target = $region16
        $region15: #{tpu_custom_call.1} parent=11 // pred_region
          %236 = vsyncadd [#allocation6], 0
          %s238 = sshll.u32 %s0, 4
          %s239 = int_to_ptr.vmem [resolvable:$true] %s238
          %241 = dma.vmem_to_smem %s239, 16, [#allocation3], [#allocation6]
        $region16: #{tpu_custom_call.1} parent=11 // pred_fallthru
          _
        // Predicated region
        $region17: #{tpu_custom_call.1} parent=11 // pred_check
          %p242 = pneg %p66
        $region18: #{tpu_custom_call.1} parent=11 // pred_check_branch
          %244 = sbr.rel (%p242) target = $region20
        $region19: #{tpu_custom_call.1} parent=11 // pred_region
          %246 = vsyncadd [#allocation8], 0
          %s248 = sshll.u32 %s1, 4
          %s249 = int_to_ptr.vmem [resolvable:$true] %s248
          %251 = dma.vmem_to_smem %s249, 16, [#allocation7], [#allocation8]
        $region20: #{tpu_custom_call.1} parent=11 // pred_fallthru
          _
        // Predicated region
        $region21: #{tpu_custom_call.1} parent=11 // pred_check
          %p252 = pneg %p191
        $region22: #{tpu_custom_call.1} parent=11 // pred_check_branch
          %254 = sbr.rel (%p252) target = $region24
        $region23: #{tpu_custom_call.1} parent=11 // pred_region
          _
        $region24: #{tpu_custom_call.1} parent=11 // pred_fallthru
          _
      $region12: #{tpu_custom_call.1} parent=5 // pred_fallthru
        _
      %p255 = scmp.lt.s32.totalorder %s24, 2
      // Predicated region
      $region25: #{tpu_custom_call.1} parent=5 // pred_check
        %p256 = pneg %p255
      $region26: #{tpu_custom_call.1} parent=5 // pred_check_branch
        %258 = sbr.rel (%p256) target = $region28
      $region27: #{tpu_custom_call.1} parent=5 // pred_region
        // Predicated region
        $region29: #{tpu_custom_call.1} parent=27 // pred_check
          %p259 = pneg %p86
        $region30: #{tpu_custom_call.1} parent=27 // pred_check_branch
          %261 = sbr.rel (%p259) target = $region32
        $region31: #{tpu_custom_call.1} parent=27 // pred_region
          %s262 = sand.u32 %s76, 1
          %s263 = scalar_lea.sflag [#allocation4], %s262
          %s264 = sand.u32 %s76, 1
          %s265 = smul.addr %s264, 8
          %s266 = scalar_lea.vmem [#allocation9], %s265
          %268 = vsyncadd %s263, 0
          %s269 = smul.addr %s24, 2
          %s270 = smul.addr %s269, 4
          %s271 = scalar_lea.hbm %s2, %s270
          %s273 = sshll.u32 %s271, 4
          %s274 = int_to_ptr.hbm [resolvable:$true] %s273
          %s275 = sshll.u32 %s266, 4
          %s276 = int_to_ptr.vmem [resolvable:$true] %s275
          %278 = dma.hbm_to_vmem [thread:$0]  %s274, 128, %s276, %s263
        $region32: #{tpu_custom_call.1} parent=27 // pred_fallthru
          _
        // Predicated region
        $region33: #{tpu_custom_call.1} parent=27 // pred_check
          %p279 = pneg %p112
        $region34: #{tpu_custom_call.1} parent=27 // pred_check_branch
          %281 = sbr.rel (%p279) target = $region36
        $region35: #{tpu_custom_call.1} parent=27 // pred_region
          %s282 = sand.u32 %s24, 1
          %s283 = scalar_lea.sflag [#allocation11], %s282
          %s284 = sand.u32 %s102, 1
          %s285 = smul.addr %s284, 8
          %s286 = scalar_lea.vmem [#allocation10], %s285
          %288 = vsyncadd %s283, 0
          %s289 = smul.addr %s24, 2
          %s290 = smul.addr %s289, 4
          %s291 = scalar_lea.hbm %s3, %s290
          %s293 = sshll.u32 %s291, 4
          %s294 = int_to_ptr.hbm [resolvable:$true] %s293
          %s295 = sshll.u32 %s286, 4
          %s296 = int_to_ptr.vmem [resolvable:$true] %s295
          %298 = dma.hbm_to_vmem [thread:$0]  %s294, 128, %s296, %s283
        $region36: #{tpu_custom_call.1} parent=27 // pred_fallthru
          _
        // Predicated region
        $region37: #{tpu_custom_call.1} parent=27 // pred_check
          %p299 = pneg %p138
        $region38: #{tpu_custom_call.1} parent=27 // pred_check_branch
          %301 = sbr.rel (%p299) target = $region40
        $region39: #{tpu_custom_call.1} parent=27 // pred_region
          %s302 = sand.u32 %s24, 1
          %s303 = scalar_lea.sflag [#allocation11], %s302
          %s304 = sand.u32 %s128, 1
          %s305 = smul.addr %s304, 8
          %s306 = scalar_lea.vmem [#allocation12], %s305
          %308 = vsyncadd %s303, 0
          %s309 = smul.addr %s24, 2
          %s310 = smul.addr %s309, 4
          %s311 = scalar_lea.hbm %s4, %s310
          %s313 = sshll.u32 %s311, 4
          %s314 = int_to_ptr.hbm [resolvable:$true] %s313
          %s315 = sshll.u32 %s306, 4
          %s316 = int_to_ptr.vmem [resolvable:$true] %s315
          %318 = dma.hbm_to_vmem [thread:$0]  %s314, 128, %s316, %s303
        $region40: #{tpu_custom_call.1} parent=27 // pred_fallthru
          _
        // Predicated region
        $region41: #{tpu_custom_call.1} parent=27 // pred_check
          %p319 = pneg %p164
        $region42: #{tpu_custom_call.1} parent=27 // pred_check_branch
          %321 = sbr.rel (%p319) target = $region44
        $region43: #{tpu_custom_call.1} parent=27 // pred_region
          %p322 = scmp.lt.s32.totalorder %s24, 1
          %s323 = scalar_select %p322, %s24, 1
          %s324 = smul.addr %s323, 4
          %s325 = scalar_lea.vmem %s5, %s324
        $region44: #{tpu_custom_call.1} parent=27 // pred_fallthru
          _
      $region28: #{tpu_custom_call.1} parent=5 // pred_fallthru
        _
      %p326 = scmp.le.s32.totalorder 1, %s24
      %p327 = scmp.lt.s32.totalorder %s24, 3
      %p328 = pnand %p326, %p327
      %p329 = pneg %p328
      // Predicated region
      $region45: #{tpu_custom_call.1} parent=5 // pred_check
        _
      $region46: #{tpu_custom_call.1} parent=5 // pred_check_branch
        %331 = sbr.rel (%p328) target = $region48
      $region47: #{tpu_custom_call.1} parent=5 // pred_region
        %s332 = ssub.s32 %s24, 1
        // Predicated region
        $region49: #{tpu_custom_call.1} parent=47 // pred_check
          %p333 = pneg %p45
        $region50: #{tpu_custom_call.1} parent=47 // pred_check_branch
          %335 = sbr.rel (%p333) target = $region52
        $region51: #{tpu_custom_call.1} parent=47 // pred_region
          %337 = dma.done [#allocation6], 16
        $region52: #{tpu_custom_call.1} parent=47 // pred_fallthru
          _
        // Predicated region
        $region53: #{tpu_custom_call.1} parent=47 // pred_check
          %p338 = pneg %p66
        $region54: #{tpu_custom_call.1} parent=47 // pred_check_branch
          %340 = sbr.rel (%p338) target = $region56
        $region55: #{tpu_custom_call.1} parent=47 // pred_region
          %342 = dma.done [#allocation8], 16
        $region56: #{tpu_custom_call.1} parent=47 // pred_fallthru
          _
        %s343 = sand.u32 %s79, 1
        %s344 = scalar_lea.sflag [#allocation4], %s343
        %s345 = sand.u32 %s79, 1
        %s346 = smul.addr %s345, 8
        %s347 = scalar_lea.vmem [#allocation9], %s346
        // Predicated region
        $region57: #{tpu_custom_call.1} parent=47 // pred_check
          %p348 = pneg %p92
        $region58: #{tpu_custom_call.1} parent=47 // pred_check_branch
          %350 = sbr.rel (%p348) target = $region60
        $region59: #{tpu_custom_call.1} parent=47 // pred_region
          %352 = dma.done %s344, 128
        $region60: #{tpu_custom_call.1} parent=47 // pred_fallthru
          _
        %s353 = sand.u32 %s29, 1
        %s354 = scalar_lea.sflag [#allocation11], %s353
        %s355 = sand.u32 %s105, 1
        %s356 = smul.addr %s355, 8
        %s357 = scalar_lea.vmem [#allocation10], %s356
        // Predicated region
        $region61: #{tpu_custom_call.1} parent=47 // pred_check
          %p358 = pneg %p118
        $region62: #{tpu_custom_call.1} parent=47 // pred_check_branch
          %360 = sbr.rel (%p358) target = $region64
        $region63: #{tpu_custom_call.1} parent=47 // pred_region
          %362 = dma.done %s354, 128
        $region64: #{tpu_custom_call.1} parent=47 // pred_fallthru
          _
        %s363 = sand.u32 %s29, 1
        %s364 = scalar_lea.sflag [#allocation11], %s363
        %s365 = sand.u32 %s131, 1
        %s366 = smul.addr %s365, 8
        %s367 = scalar_lea.vmem [#allocation12], %s366
        // Predicated region
        $region65: #{tpu_custom_call.1} parent=47 // pred_check
          %p368 = pneg %p144
        $region66: #{tpu_custom_call.1} parent=47 // pred_check_branch
          %370 = sbr.rel (%p368) target = $region68
        $region67: #{tpu_custom_call.1} parent=47 // pred_region
          %372 = dma.done %s364, 128
        $region68: #{tpu_custom_call.1} parent=47 // pred_fallthru
          _
        %373 = sfence
        %p374 = pneg %p45
        %p375 = pneg %p42
        %p376 = pneg %p66
        %p377 = pneg %p63
        %s378 = sand.u32 %s79, 1
        %s379 = scalar_lea.sflag [#allocation4], %s378
        %s380 = sand.u32 %s79, 1
        %s381 = smul.addr %s380, 8
        %s382 = scalar_lea.vmem [#allocation9], %s381
        %p383 = pneg %p92
        %p384 = pneg %p89
        %s385 = sand.u32 %s29, 1
        %s386 = scalar_lea.sflag [#allocation11], %s385
        %s387 = sand.u32 %s105, 1
        %s388 = smul.addr %s387, 8
        %s389 = scalar_lea.vmem [#allocation10], %s388
        %p390 = pneg %p118
        %p391 = pneg %p115
        %s392 = sand.u32 %s29, 1
        %s393 = scalar_lea.sflag [#allocation11], %s392
        %s394 = sand.u32 %s131, 1
        %s395 = smul.addr %s394, 8
        %s396 = scalar_lea.vmem [#allocation12], %s395
        %p397 = pneg %p144
        %p398 = pneg %p141
        %p399 = scmp.lt.s32.totalorder %s29, 1
        %s400 = scalar_select %p399, %s29, 1
        %s401 = smul.addr %s400, 4
        %s402 = scalar_lea.vmem %s5, %s401
        %p403 = pneg %p170
        %p404 = pneg %p167
        %p405 = pneg %p191
        %p406 = pneg %p188
        %p407 = pneg %p217
        %p408 = pneg %p214
        %s409 = sand.u32 %s204, 1
        %s410 = scalar_lea.sflag [#allocation5], %s409
        %s411 = sand.u32 %s204, 1
        %s412 = smul.addr %s411, 8
        %s413 = scalar_lea.vmem [#allocation13], %s412
        %p414 = scmp.lt.s32.totalorder %s29, 1
        %s415 = scalar_select %p414, %s29, 1
        %s416 = smul.addr %s415, 4
        %s417 = scalar_lea.vmem %s5, %s416
        %s418 = sld [smem:[#allocation7]]
        %s419 = sld [smem:[#allocation7 + $0x1]]
        %v420 = vld [vmem:[%s6] sm:$0xf]
        %s421 = sld [smem:[#allocation3 + %s29]]
        %v422 = vld [vmem:[%s357] sm:$0xff]
        %v423 = vstv %s418
        %v424 = vmul.f32 %v423, %v422
        %v425 = vld [vmem:[%s367] sm:$0xff]
        %v426 = vstv %s419
        %v427 = vmul.f32 %v426, %v425
        %v428 = vadd.f32 %v424, %v427
        %v429 = vld [vmem:[%s347] sm:$0xff]
        %431 = vst [vmem:[#allocation1] ss:$2 sm:$0xff] %v429
        %v432 = vld.sshfl [vmem:[#allocation1] sm:$0xff pattern:$0x75316420]
        %v433 = vld.sshfl [vmem:[#allocation1 + $0x8] sm:$0xff pattern:$0x75316420]
        %436 = vst [vmem:[#allocation2] sm:$0xf] %v432
        %437 = vst [vmem:[#allocation2 + $0x8] sm:$0xf] %v433
        %s439 = scalar_lea.vmem [#allocation1], 1
        %440 = vst [vmem:[%s439] ss:$2 sm:$0xff] %v428
        %v441 = vld.sshfl [vmem:[#allocation1] sm:$0xff pattern:$0x75316420]
        %v442 = vld.sshfl [vmem:[#allocation1 + $0x8] sm:$0xff pattern:$0x75316420]
        %445 = vst [vmem:[#allocation2] sm:$0xf0] %v441
        %446 = vst [vmem:[#allocation2 + $0x8] sm:$0xf0] %v442
        %v447 = vld [vmem:[#allocation2] sm:$0xff]
        %v448 = vld [vmem:[#allocation2 + $0x8] sm:$0xff]
        %vm449 = vcmask 64512
        %v451 = vsel %vm449, %v420, 0
        %453 = vmatpush.msra.mxu0 0.0
        %454 = vmatpush.msra.mxu0 0.0
        %455 = vmatpush.msra.mxu0 0.0
        %456 = vmatpush.msra.mxu0 0.0
        %457 = vmatpush.msra.mxu0 0.0
        %458 = vmatpush.msra.mxu0 0.0
        %459 = vmatpush.msra.mxu0 0.0
        %460 = vmatpush.msra.mxu0 0.0
        %461 = vmatpush.msra.mxu0 0.0
        %462 = vmatpush.msra.mxu0 0.0
        %463 = vmatpush.msra.mxu0 0.0
        %464 = vmatpush.msra.mxu0 0.0
        %465 = vmatpush.msra.mxu0 0.0
        %466 = vmatpush.msra.mxu0 0.0
        %467 = vmatpush.msra.mxu0 0.0
        %468 = vmatpush.msra.mxu0 %v447
        %469 = vmatmul.f32.gmra.mxu0 %v451
        %v470 = vpop.f32.mrf.mxu0
        %v471 = vadd.f32 0.0, %v470
        %472 = vdwg.mxu0
        %473 = vmatpush.msra.mxu0 0.0
        %474 = vmatpush.msra.mxu0 0.0
        %475 = vmatpush.msra.mxu0 0.0
        %476 = vmatpush.msra.mxu0 0.0
        %477 = vmatpush.msra.mxu0 0.0
        %478 = vmatpush.msra.mxu0 0.0
        %479 = vmatpush.msra.mxu0 0.0
        %480 = vmatpush.msra.mxu0 0.0
        %481 = vmatpush.msra.mxu0 0.0
        %482 = vmatpush.msra.mxu0 0.0
        %483 = vmatpush.msra.mxu0 0.0
        %484 = vmatpush.msra.mxu0 0.0
        %485 = vmatpush.msra.mxu0 0.0
        %486 = vmatpush.msra.mxu0 0.0
        %487 = vmatpush.msra.mxu0 0.0
        %488 = vmatpush.msra.mxu0 %v448
        %489 = vmatmul.f32.gmra.mxu0 %v451
        %v490 = vpop.f32.mrf.mxu0
        %v491 = vadd.f32 0.0, %v490
        %492 = vdwg.mxu0
        %v493 = vstv %s421
        %v494 = vmul.f32 %v493, %v471
        %v495 = vmul.f32 %v493, %v491
        %v496 = vld [vmem:[%s417] sm:$0xf]
        %498 = vset.pattern.permute.xlu0 0
        %499 = vperm.xlu0 %498, %v496
        %v500 = vpop.permute.xlu0 %499
        %v502 = vadd.f32 %v494, %v500
        %v503 = vadd.f32 %v495, %v500
        %v506 = vrot.slane %v503, 4
        %vm507 = vcmask 1043456
        %v508 = vsel %vm507, %v502, %v506
        %510 = vst [vmem:[%s413] sm:$0xff] %v508
        %s511 = sand.u32 %s204, 1
        %s512 = scalar_lea.sflag [#allocation5], %s511
        %s513 = sand.u32 %s204, 1
        %s514 = smul.addr %s513, 8
        %s515 = scalar_lea.vmem [#allocation13], %s514
        // Predicated region
        $region69: #{tpu_custom_call.1} parent=47 // pred_check
          %p516 = pneg %p214
        $region70: #{tpu_custom_call.1} parent=47 // pred_check_branch
          %518 = sbr.rel (%p516) target = $region72
        $region71: #{tpu_custom_call.1} parent=47 // pred_region
          %520 = vsyncadd %s512, 0
          %s521 = smul.addr %s29, 2
          %s522 = smul.addr %s521, 4
          %s523 = scalar_lea.hbm %s7, %s522
          %s525 = sshll.u32 %s515, 4
          %s526 = int_to_ptr.vmem [resolvable:$true] %s525
          %s527 = sshll.u32 %s523, 4
          %s528 = int_to_ptr.hbm [resolvable:$true] %s527
          %530 = dma.vmem_to_hbm [thread:$0]  %s526, 128, %s528, %s512
        $region72: #{tpu_custom_call.1} parent=47 // pred_fallthru
          _
      $region48: #{tpu_custom_call.1} parent=5 // pred_fallthru
        _
      %p531 = scmp.le.s32.totalorder 2, %s24
      // Predicated region
      $region73: #{tpu_custom_call.1} parent=5 // pred_check
        %p532 = pneg %p531
      $region74: #{tpu_custom_call.1} parent=5 // pred_check_branch
        %534 = sbr.rel (%p532) target = $region76
      $region75: #{tpu_custom_call.1} parent=5 // pred_region
        %s535 = ssub.s32 %s24, 2
        // Predicated region
        $region77: #{tpu_custom_call.1} parent=75 // pred_check
          %p536 = pneg %p220
        $region78: #{tpu_custom_call.1} parent=75 // pred_check_branch
          %538 = sbr.rel (%p536) target = $region80
        $region79: #{tpu_custom_call.1} parent=75 // pred_region
          %s539 = sand.u32 %s205, 1
          %s540 = scalar_lea.sflag [#allocation5], %s539
          %s541 = sand.u32 %s205, 1
          %s542 = smul.addr %s541, 8
          %s543 = scalar_lea.vmem [#allocation13], %s542
          %545 = dma.done %s540, 128
        $region80: #{tpu_custom_call.1} parent=75 // pred_fallthru
          _
      $region76: #{tpu_custom_call.1} parent=5 // pred_fallthru
        _
    $region6: #{tpu_custom_call.1} parent=1 // loop_footer
      %s28 = sadd.s32 1, %s24
    $region7: #{tpu_custom_call.1} parent=1 // loop_footer_branch
      %23 = sbr.rel target = $region3
    $region8: #{tpu_custom_call.1} parent=1 // loop_exit
      _
    %546 = vsyncpa [#allocation4], 1
    %s547 = scalar_lea.sflag [#allocation4], 1
    %548 = vsyncpa %s547, 1
    %549 = vsyncpa [#allocation11], 1
    %s550 = scalar_lea.sflag [#allocation11], 1
    %551 = vsyncpa %s550, 1
    %552 = vsyncpa [#allocation5], 1
    %s553 = scalar_lea.sflag [#allocation5], 1
    %554 = vsyncpa %s553, 1
    %555 = vsyncpa [#allocation6], 1
    %s556 = scalar_lea.sflag [#allocation6], 1
    %557 = vsyncpa %s556, 1
    %558 = vsyncpa [#allocation8], 1

</llo_original>
